<compile_context>
chip_gen: v5e
topology: v5e:2x2
jax: 0.10.0
libtpu: 0.0.40
codegen_flags: <defaults>
</compile_context>

<pallas_src>
import functools

import jax
import jax.numpy as jnp
from jax.experimental import pallas as pl
from jax.experimental.pallas import tpu as pltpu

EMB = 128       # style embedding dim
DEPTH = 4       # number of EqualLinear + LeakyReLU layers
LR_MUL = 0.1
LEAK = 0.2
NORM_EPS = 1e-12  # torch.nn.functional.normalize default eps


def _style_vectorizer_kernel(x_ref, wT_ref, b_ref, o_ref, *,
                             depth, leak, eps, compute_dtype, approx_recip):
    """One (TM, EMB) batch tile: normalize + depth x (linear + leaky_relu).

    x_ref : (TM, EMB)           f32
    wT_ref: (depth, EMB, EMB)   compute_dtype, pre-transposed [d, in, out],
                                lr_mul already folded in.
    b_ref : (depth, EMB)        f32, lr_mul already folded in.
    o_ref : (TM, EMB)           f32
    """
    x = x_ref[...].astype(jnp.float32)

    # F.normalize(x, dim=1): x / max(||x||_2, eps)
    norm = jnp.sqrt(jnp.sum(x * x, axis=1, keepdims=True))
    denom = jnp.maximum(norm, eps)
    if approx_recip:
        # EUP slot (otherwise idle) instead of a VPU divide on the crit path.
        x = x * pl.reciprocal(denom, approx=True)
    else:
        x = x / denom  # exact, reference-faithful

    b_all = b_ref[...]  # (depth, EMB), lr_mul already folded in

    # Static (unrolled) loop over the small fixed depth.
    for d in range(depth):
        y = jnp.dot(x.astype(compute_dtype), wT_ref[d],
                    preferred_element_type=jnp.float32)
        y = y + b_all[d][None, :]
        x = jnp.maximum(y, leak * y)  # LeakyReLU(leak): mul+max, no select

    o_ref[...] = x.astype(o_ref.dtype)


def prepare_params(weights, biases, lr_mul=LR_MUL, compute_dtype=jnp.float32):
    """One-time parameter prep (cache the result; do NOT call per forward).

    weights: (depth, emb, emb) in PyTorch [out, in] layout.
    biases : (depth, emb).
    Returns (wT_scaled, b_scaled): transposed to [in, out], lr_mul folded in,
    weights cast to the MXU compute dtype (f32 exact, bf16 fast).
    """
    wT = jnp.transpose(weights.astype(jnp.float32), (0, 2, 1)) * lr_mul
    b = biases.astype(jnp.float32) * lr_mul
    return wT.astype(compute_dtype), b


def style_vectorizer(x, wT_scaled, b_scaled, *, tm=128, approx_recip=False):
    """x: (B, emb) latents; wT_scaled/b_scaled from prepare_params().

    tm: batch tile. 128 is native on v5e; use 256 on v6e/v7x (2x256^2 MXU).
    """
    B, emb = x.shape
    depth = wT_scaled.shape[0]
    compute_dtype = wT_scaled.dtype

    # Pad the batch to a tile multiple so the grid is exact (padded rows are
    # zeros -> normalize keeps them zero; they are sliced off below).
    pB = pl.cdiv(B, tm) * tm
    xf = x.astype(jnp.float32)
    if pB != B:
        xf = jnp.pad(xf, ((0, pB - B), (0, 0)))

    kernel = functools.partial(
        _style_vectorizer_kernel,
        depth=depth, leak=LEAK, eps=NORM_EPS,
        compute_dtype=compute_dtype, approx_recip=approx_recip)

    out = pl.pallas_call(
        kernel,
        out_shape=jax.ShapeDtypeStruct((pB, emb), jnp.float32),
        grid=(pB // tm,),
        in_specs=[
            pl.BlockSpec((tm, emb), lambda i: (i, 0)),
            # Constant index maps -> weights/biases stay VMEM-resident
            # across the whole batch grid (one DMA total).
            pl.BlockSpec((depth, emb, emb), lambda i: (0, 0, 0)),
            pl.BlockSpec((depth, emb), lambda i: (0, 0)),
        ],
        out_specs=pl.BlockSpec((tm, emb), lambda i: (i, 0)),
        compiler_params=pltpu.CompilerParams(
            dimension_semantics=("parallel",)),  # v7x: shard batch over 2 TCs
    )(xf, wT_scaled, b_scaled)

    return out[:B]


def reference_forward(x, weights, biases, lr_mul=LR_MUL):
    """Pure-JAX reference mirroring the PyTorch module."""
    x = x.astype(jnp.float32)
    norm = jnp.sqrt(jnp.sum(x * x, axis=1, keepdims=True))
    x = x / jnp.maximum(norm, NORM_EPS)
    for d in range(weights.shape[0]):
        y = x @ (weights[d] * lr_mul).T + biases[d] * lr_mul
        x = jnp.where(y >= 0, y, LEAK * y)
    return x


if __name__ == "__main__":
    key = jax.random.PRNGKey(0)
    k_x, k_w, k_b = jax.random.split(key, 3)

    # Batch chosen to exercise both the grid (2 tiles of 128) and the padding
    # path; still small. EqualLinear init is weight=randn(out,in), bias=zeros;
    # random biases used here so the bias path is actually tested.
    BATCH = 200
    x = jax.random.normal(k_x, (BATCH, EMB), dtype=jnp.float32)
    weights = jax.random.normal(k_w, (DEPTH, EMB, EMB), dtype=jnp.float32)
    biases = jax.random.normal(k_b, (DEPTH, EMB), dtype=jnp.float32)

    ref = reference_forward(x, weights, biases)

    # Exact path: f32 MXU + exact divide -> matches PyTorch semantics tightly.
    wT32, b32 = prepare_params(weights, biases, compute_dtype=jnp.float32)
    out = jax.block_until_ready(style_vectorizer(x, wT32, b32, tm=128))
    assert out.shape == (BATCH, EMB)
    assert jnp.allclose(out, ref, atol=1e-4, rtol=1e-4)

    # Fast path (recommended on v6e/v7x once batch makes the kernel MXU-bound):
    # bf16 MXU inputs with f32 accumulation + EUP approx reciprocal.
    wTb, bb = prepare_params(weights, biases, compute_dtype=jnp.bfloat16)
    out_fast = jax.block_until_ready(
        style_vectorizer(x, wTb, bb, tm=128, approx_recip=True))
    assert out_fast.shape == (BATCH, EMB)
    assert jnp.allclose(out_fast, ref, atol=5e-2, rtol=5e-2)

    print("KERNEL_OK")
</pallas_src>

<mosaic_0001>
module attributes {stable_mosaic.version = 11 : i64} {
  func.func @_style_vectorizer_kernel(%arg0: i32, %arg1: memref<128x128xf32, #tpu.memory_space<vmem>>, %arg2: memref<4x128x128xf32, #tpu.memory_space<vmem>>, %arg3: memref<4x128xf32, #tpu.memory_space<vmem>>, %arg4: memref<128x128xf32, #tpu.memory_space<vmem>>) attributes {dimension_semantics = [#tpu.dimension_semantics<parallel>], iteration_bounds = array<i64: 2>, scalar_prefetch = 0 : i64, scratch_operands = 0 : i64, tpu.core_type = #tpu.core_type<tc>, window_params = [{transform_indices = @transform_0, window_bounds = array<i64: 128, 128>}, {pipeline_mode = #tpu.pipeline_mode<synchronous>, transform_indices = @transform_1, window_bounds = array<i64: 4, 128, 128>}, {pipeline_mode = #tpu.pipeline_mode<synchronous>, transform_indices = @transform_2, window_bounds = array<i64: 4, 128>}, {transform_indices = @transform_3, window_bounds = array<i64: 128, 128>}]} {
    %c0 = arith.constant 0 : index
    %c0_0 = arith.constant 0 : index
    %0 = vector.load %arg1[%c0, %c0_0] : memref<128x128xf32, #tpu.memory_space<vmem>>, vector<128x128xf32>
    %1 = arith.mulf %0, %0 : vector<128x128xf32>
    %cst = arith.constant dense<0.000000e+00> : vector<128xf32>
    %2 = vector.multi_reduction <add>, %1, %cst [1] : vector<128x128xf32> to vector<128xf32>
    %3 = vector.shape_cast %2 : vector<128xf32> to vector<128x1xf32>
    %4 = math.sqrt %3 : vector<128x1xf32>
    %cst_1 = arith.constant 9.99999996E-13 : f32
    %5 = vector.broadcast %cst_1 : f32 to vector<128x1xf32>
    %6 = arith.maximumf %4, %5 : vector<128x1xf32>
    %7 = vector.broadcast %6 : vector<128x1xf32> to vector<128x128xf32>
    %8 = arith.divf %0, %7 : vector<128x128xf32>
    %c0_2 = arith.constant 0 : index
    %c0_3 = arith.constant 0 : index
    %9 = vector.load %arg3[%c0_2, %c0_3] : memref<4x128xf32, #tpu.memory_space<vmem>>, vector<4x128xf32>
    %c0_4 = arith.constant 0 : index
    %c0_5 = arith.constant 0 : index
    %c0_6 = arith.constant 0 : index
    %10 = vector.load %arg2[%c0_4, %c0_5, %c0_6] : memref<4x128x128xf32, #tpu.memory_space<vmem>>, vector<1x128x128xf32>
    %11 = vector.shape_cast %10 : vector<1x128x128xf32> to vector<128x128xf32>
    %cst_7 = arith.constant dense<0.000000e+00> : vector<128x128xf32>
    %12 = tpu.matmul %8, %11, %cst_7 {dimension_numbers = #tpu.dot_dimension_numbers<[1], [0], [0], [1], [0, 0, 1, 1], [], []>} : vector<128x128xf32>, vector<128x128xf32>, vector<128x128xf32> -> vector<128x128xf32>
    %13 = vector.extract_strided_slice %9 {offsets = [0, 0], sizes = [1, 128], strides = [1, 1]} : vector<4x128xf32> to vector<1x128xf32>
    %14 = vector.shape_cast %13 : vector<1x128xf32> to vector<128xf32>
    %15 = vector.shape_cast %14 : vector<128xf32> to vector<1x128xf32>
    %16 = vector.broadcast %15 : vector<1x128xf32> to vector<128x128xf32>
    %17 = arith.addf %12, %16 : vector<128x128xf32>
    %cst_8 = arith.constant 2.000000e-01 : f32
    %18 = vector.broadcast %cst_8 : f32 to vector<128x128xf32>
    %19 = arith.mulf %18, %17 : vector<128x128xf32>
    %20 = arith.maximumf %17, %19 : vector<128x128xf32>
    %c1 = arith.constant 1 : index
    %c0_9 = arith.constant 0 : index
    %c0_10 = arith.constant 0 : index
    %21 = vector.load %arg2[%c1, %c0_9, %c0_10] : memref<4x128x128xf32, #tpu.memory_space<vmem>>, vector<1x128x128xf32>
    %22 = vector.shape_cast %21 : vector<1x128x128xf32> to vector<128x128xf32>
    %cst_11 = arith.constant dense<0.000000e+00> : vector<128x128xf32>
    %23 = tpu.matmul %20, %22, %cst_11 {dimension_numbers = #tpu.dot_dimension_numbers<[1], [0], [0], [1], [0, 0, 1, 1], [], []>} : vector<128x128xf32>, vector<128x128xf32>, vector<128x128xf32> -> vector<128x128xf32>
    %24 = vector.extract_strided_slice %9 {offsets = [1, 0], sizes = [1, 128], strides = [1, 1]} : vector<4x128xf32> to vector<1x128xf32>
    %25 = vector.shape_cast %24 : vector<1x128xf32> to vector<128xf32>
    %26 = vector.shape_cast %25 : vector<128xf32> to vector<1x128xf32>
    %27 = vector.broadcast %26 : vector<1x128xf32> to vector<128x128xf32>
    %28 = arith.addf %23, %27 : vector<128x128xf32>
    %cst_12 = arith.constant 2.000000e-01 : f32
    %29 = vector.broadcast %cst_12 : f32 to vector<128x128xf32>
    %30 = arith.mulf %29, %28 : vector<128x128xf32>
    %31 = arith.maximumf %28, %30 : vector<128x128xf32>
    %c2 = arith.constant 2 : index
    %c0_13 = arith.constant 0 : index
    %c0_14 = arith.constant 0 : index
    %32 = vector.load %arg2[%c2, %c0_13, %c0_14] : memref<4x128x128xf32, #tpu.memory_space<vmem>>, vector<1x128x128xf32>
    %33 = vector.shape_cast %32 : vector<1x128x128xf32> to vector<128x128xf32>
    %cst_15 = arith.constant dense<0.000000e+00> : vector<128x128xf32>
    %34 = tpu.matmul %31, %33, %cst_15 {dimension_numbers = #tpu.dot_dimension_numbers<[1], [0], [0], [1], [0, 0, 1, 1], [], []>} : vector<128x128xf32>, vector<128x128xf32>, vector<128x128xf32> -> vector<128x128xf32>
    %35 = vector.extract_strided_slice %9 {offsets = [2, 0], sizes = [1, 128], strides = [1, 1]} : vector<4x128xf32> to vector<1x128xf32>
    %36 = vector.shape_cast %35 : vector<1x128xf32> to vector<128xf32>
    %37 = vector.shape_cast %36 : vector<128xf32> to vector<1x128xf32>
    %38 = vector.broadcast %37 : vector<1x128xf32> to vector<128x128xf32>
    %39 = arith.addf %34, %38 : vector<128x128xf32>
    %cst_16 = arith.constant 2.000000e-01 : f32
    %40 = vector.broadcast %cst_16 : f32 to vector<128x128xf32>
    %41 = arith.mulf %40, %39 : vector<128x128xf32>
    %42 = arith.maximumf %39, %41 : vector<128x128xf32>
    %c3 = arith.constant 3 : index
    %c0_17 = arith.constant 0 : index
    %c0_18 = arith.constant 0 : index
    %43 = vector.load %arg2[%c3, %c0_17, %c0_18] : memref<4x128x128xf32, #tpu.memory_space<vmem>>, vector<1x128x128xf32>
    %44 = vector.shape_cast %43 : vector<1x128x128xf32> to vector<128x128xf32>
    %cst_19 = arith.constant dense<0.000000e+00> : vector<128x128xf32>
    %45 = tpu.matmul %42, %44, %cst_19 {dimension_numbers = #tpu.dot_dimension_numbers<[1], [0], [0], [1], [0, 0, 1, 1], [], []>} : vector<128x128xf32>, vector<128x128xf32>, vector<128x128xf32> -> vector<128x128xf32>
    %46 = vector.extract_strided_slice %9 {offsets = [3, 0], sizes = [1, 128], strides = [1, 1]} : vector<4x128xf32> to vector<1x128xf32>
    %47 = vector.shape_cast %46 : vector<1x128xf32> to vector<128xf32>
    %48 = vector.shape_cast %47 : vector<128xf32> to vector<1x128xf32>
    %49 = vector.broadcast %48 : vector<1x128xf32> to vector<128x128xf32>
    %50 = arith.addf %45, %49 : vector<128x128xf32>
    %cst_20 = arith.constant 2.000000e-01 : f32
    %51 = vector.broadcast %cst_20 : f32 to vector<128x128xf32>
    %52 = arith.mulf %51, %50 : vector<128x128xf32>
    %53 = arith.maximumf %50, %52 : vector<128x128xf32>
    %c0_21 = arith.constant 0 : index
    %c0_22 = arith.constant 0 : index
    %54 = vector.load %arg4[%c0_21, %c0_22] : memref<128x128xf32, #tpu.memory_space<vmem>>, vector<128x128xf32>
    tpu.vector_store %arg4[%c0_21, %c0_22], %53 {strides = array<i32>} : memref<128x128xf32, #tpu.memory_space<vmem>>, vector<128x128xf32>,
    return
  }
  func.func @transform_0(%arg0: i32) -> (i32, i32) {
    %c0_i32 = arith.constant 0 : i32
    %c0_i32_0 = arith.constant 0 : i32
    return %arg0, %c0_i32 : i32, i32
  }
  func.func @transform_1(%arg0: i32) -> (i32, i32, i32) {
    %c0_i32 = arith.constant 0 : i32
    %c0_i32_0 = arith.constant 0 : i32
    %c0_i32_1 = arith.constant 0 : i32
    %c0_i32_2 = arith.constant 0 : i32
    return %c0_i32, %c0_i32_0, %c0_i32_1 : i32, i32, i32
  }
  func.func @transform_2(%arg0: i32) -> (i32, i32) {
    %c0_i32 = arith.constant 0 : i32
    %c0_i32_0 = arith.constant 0 : i32
    %c0_i32_1 = arith.constant 0 : i32
    return %c0_i32, %c0_i32_0 : i32, i32
  }
  func.func @transform_3(%arg0: i32) -> (i32, i32) {
    %c0_i32 = arith.constant 0 : i32
    %c0_i32_0 = arith.constant 0 : i32
    return %arg0, %c0_i32 : i32, i32
  }
}

</mosaic_0001>

<llo_original>
// kernel: tpu_custom_call.1
$region0: #{tpu_custom_call.1}
  #allocation0 [shape = 'u32[]', space=smem, size = 0x4, offset = 0x4, fixed_abs, tag = 'smem constant byte address 0x4 - core index']
  #allocation1 [shape = 'u32[72,128]{1,0:T(1,128)}', space=vmem, size = 0x9000, scoped, tag = 'internal scratch']
  %s0 = inlined_call_operand.hbm [shape: f32[256,128], index: 0, kind: input, shape index: {}]
  %s1 = inlined_call_operand.hbm [shape: f32[4,128,128], index: 1, kind: input, shape index: {}]
  %s2 = inlined_call_operand.hbm [shape: f32[4,128], index: 2, kind: input, shape index: {}]
  %s3 = inlined_call_operand.hbm [shape: f32[256,128], index: 3, kind: output, shape index: {}]
  %s4 = sld [smem:[#allocation0]]
  $region57: #{tpu_custom_call.1} parent=0
    _
  %s6 = ssub.s32 1, %s4
  %s7 = scalar_select 0, %s6, %s4
  $region1: #{tpu_custom_call.1} parent=0
    #allocation2 [shape = 'u8[131072]{0}', space=vmem, size = 0x20000, scoped, tag = 'input window, operand 0']
    #allocation3 [shape = 's32[2]{0}', space=sflag, size = 0x8, scoped, tag = 'scoped memory for tpu_custom_call.1']
    #allocation4 [shape = 's32[2]{0}', space=sflag, size = 0x8, scoped, tag = 'scoped memory for tpu_custom_call.1']
    #allocation5 [shape = 'u8[262144]{0}', space=vmem, size = 0x40000, scoped, tag = 'input window, operand 1, single buffered']
    #allocation6 [shape = 's32[1]{0}', space=sflag, size = 0x4, scoped, tag = 'scoped memory for tpu_custom_call.1']
    #allocation7 [shape = 'u8[2048]{0}', space=vmem, size = 0x800, scoped, tag = 'input window, operand 2, single buffered']
    #allocation8 [shape = 'u8[131072]{0}', space=vmem, size = 0x20000, scoped, tag = 'output window, operand 0']
    %8 = vsyncpa [#allocation3], 0
    %s9 = scalar_lea.sflag [#allocation3], 1
    %10 = vsyncpa %s9, 0
    %11 = vsyncpa [#allocation6], 0
    %12 = vsyncpa [#allocation4], 0
    %s13 = scalar_lea.sflag [#allocation4], 1
    %14 = vsyncpa %s13, 0
    loop: start=0, step=1, limit=4
    $region2: #{tpu_custom_call.1} parent=1 // loop_pre_header
      _
    $region3: #{tpu_custom_call.1} parent=1 // loop_header
      %s16 = sphi 0, %s20
      %p17 = scmp.ge.s32.totalorder %s16, 4
      %s26 = sphi 0, %s28
      %s29 = sphi 0, %s26
      %s30 = sphi 0, %s29
      %s46 = sphi 0, %s30
      %s50 = sphi 0, %s50
      %s52 = sphi 0, %s50
      %s53 = sphi 0, %s52
      %s67 = sphi 0, %s53
      %s71 = sphi 0, %s71
      %s73 = sphi 0, %s71
      %s74 = sphi 0, %s73
      %s88 = sphi 0, %s74
      %s94 = sphi 0, %s96
      %s97 = sphi 0, %s94
      %s98 = sphi 0, %s97
      %s114 = sphi 0, %s98
    $region4: #{tpu_custom_call.1} parent=1 // loop_header_branch
      %19 = sbr.rel (%p17) target = $region8
    $region5: #{tpu_custom_call.1} parent=1 // loop_body
      %s21 = ssub.s32 %s16, 1
      %s22 = ssub.s32 %s16, 2
      %s23 = sadd.s32 %s16, 1
      %s24 = ssub.s32 %s16, %s23
      %p25 = scmp.eq.s32.totalorder %s24, 0
      %s27 = sadd.s32 %s26, 1
      %s28 = scalar_select %p25, %s26, %s27
      %p31 = pneg %p25
      %p32 = scmp.eq.s32.totalorder %s16, 1
      %p33 = por %p31, %p32
      %p34 = scmp.ne.s32.totalorder %s26, %s29
      %p35 = scmp.eq.s32.totalorder %s16, 0
      %p36 = por %p34, %p35
      %p37 = scmp.ne.s32.totalorder %s26, %s29
      %p38 = scmp.eq.s32.totalorder %s21, 1
      %p39 = por %p37, %p38
      %p40 = scmp.ne.s32.totalorder %s29, %s30
      %p41 = scmp.eq.s32.totalorder %s21, 0
      %p42 = por %p40, %p41
      %p43 = scmp.ne.s32.totalorder %s29, %s30
      %p44 = scmp.eq.s32.totalorder %s22, 1
      %p45 = por %p43, %p44
      %p47 = scmp.ne.s32.totalorder %s30, %s46
      %p48 = scmp.eq.s32.totalorder %s22, 0
      %p49 = por %p47, %p48
      %s51 = sadd.s32 %s50, 1
      %p54 = scmp.eq.s32.totalorder %s16, 1
      %p55 = scmp.ne.s32.totalorder %s50, %s52
      %p56 = scmp.eq.s32.totalorder %s16, 0
      %p57 = por %p55, %p56
      %p58 = scmp.ne.s32.totalorder %s50, %s52
      %p59 = scmp.eq.s32.totalorder %s21, 1
      %p60 = por %p58, %p59
      %p61 = scmp.ne.s32.totalorder %s52, %s53
      %p62 = scmp.eq.s32.totalorder %s21, 0
      %p63 = por %p61, %p62
      %p64 = scmp.ne.s32.totalorder %s52, %s53
      %p65 = scmp.eq.s32.totalorder %s22, 1
      %p66 = por %p64, %p65
      %p68 = scmp.ne.s32.totalorder %s53, %s67
      %p69 = scmp.eq.s32.totalorder %s22, 0
      %p70 = por %p68, %p69
      %s72 = sadd.s32 %s71, 1
      %p75 = scmp.eq.s32.totalorder %s16, 1
      %p76 = scmp.ne.s32.totalorder %s71, %s73
      %p77 = scmp.eq.s32.totalorder %s16, 0
      %p78 = por %p76, %p77
      %p79 = scmp.ne.s32.totalorder %s71, %s73
      %p80 = scmp.eq.s32.totalorder %s21, 1
      %p81 = por %p79, %p80
      %p82 = scmp.ne.s32.totalorder %s73, %s74
      %p83 = scmp.eq.s32.totalorder %s21, 0
      %p84 = por %p82, %p83
      %p85 = scmp.ne.s32.totalorder %s73, %s74
      %p86 = scmp.eq.s32.totalorder %s22, 1
      %p87 = por %p85, %p86
      %p89 = scmp.ne.s32.totalorder %s74, %s88
      %p90 = scmp.eq.s32.totalorder %s22, 0
      %p91 = por %p89, %p90
      %s92 = ssub.s32 %s16, %s23
      %p93 = scmp.eq.s32.totalorder %s92, 0
      %s95 = sadd.s32 %s94, 1
      %s96 = scalar_select %p93, %s94, %s95
      %p99 = pneg %p93
      %p100 = scmp.eq.s32.totalorder %s16, 1
      %p101 = por %p99, %p100
      %p102 = scmp.ne.s32.totalorder %s94, %s97
      %p103 = scmp.eq.s32.totalorder %s16, 0
      %p104 = por %p102, %p103
      %p105 = scmp.ne.s32.totalorder %s94, %s97
      %p106 = scmp.eq.s32.totalorder %s21, 1
      %p107 = por %p105, %p106
      %p108 = scmp.ne.s32.totalorder %s97, %s98
      %p109 = scmp.eq.s32.totalorder %s21, 0
      %p110 = por %p108, %p109
      %p111 = scmp.ne.s32.totalorder %s97, %s98
      %p112 = scmp.eq.s32.totalorder %s22, 1
      %p113 = por %p111, %p112
      %p115 = scmp.ne.s32.totalorder %s98, %s114
      %p116 = scmp.eq.s32.totalorder %s22, 0
      %p117 = por %p115, %p116
      %p118 = scmp.le.s32.totalorder 1, %s16
      %p119 = scmp.lt.s32.totalorder %s16, 3
      %p120 = pnand %p118, %p119
      %p121 = pneg %p120
      // Predicated region
      $region9: #{tpu_custom_call.1} parent=5 // pred_check
        _
      $region10: #{tpu_custom_call.1} parent=5 // pred_check_branch
        %123 = sbr.rel (%p120) target = $region12
      $region11: #{tpu_custom_call.1} parent=5 // pred_region
        %s124 = ssub.s32 %s16, 1
        // Predicated region
        $region13: #{tpu_custom_call.1} parent=11 // pred_check
          %p125 = pneg %p63
        $region14: #{tpu_custom_call.1} parent=11 // pred_check_branch
          %127 = sbr.rel (%p125) target = $region16
        $region15: #{tpu_custom_call.1} parent=11 // pred_region
          %129 = vsyncadd [#allocation6], 0
          %s130 = sshll.u32 %s1, 4
          %s131 = int_to_ptr.hbm [resolvable:$true] %s130
          %s132 = sshll.u32 [#allocation5], 4
          %s133 = int_to_ptr.vmem [resolvable:$true] %s132
          %138 = dma.hbm_to_vmem [thread:$0]  %s131, 8192, %s133, [#allocation6], 128, 128, 8
        $region16: #{tpu_custom_call.1} parent=11 // pred_fallthru
          _
        // Predicated region
        $region17: #{tpu_custom_call.1} parent=11 // pred_check
          %p139 = pneg %p84
        $region18: #{tpu_custom_call.1} parent=11 // pred_check_branch
          %141 = sbr.rel (%p139) target = $region20
        $region19: #{tpu_custom_call.1} parent=11 // pred_region
          %143 = vsyncadd [#allocation6], 0
          %s145 = sshll.u32 %s2, 4
          %s146 = int_to_ptr.hbm [resolvable:$true] %s145
          %s147 = sshll.u32 [#allocation7], 4
          %s148 = int_to_ptr.vmem [resolvable:$true] %s147
          %150 = dma.hbm_to_vmem [thread:$0]  %s146, 64, %s148, [#allocation6]
        $region20: #{tpu_custom_call.1} parent=11 // pred_fallthru
          _
      $region12: #{tpu_custom_call.1} parent=5 // pred_fallthru
        _
      %p151 = scmp.lt.s32.totalorder %s16, 2
      // Predicated region
      $region21: #{tpu_custom_call.1} parent=5 // pred_check
        %p152 = pneg %p151
      $region22: #{tpu_custom_call.1} parent=5 // pred_check_branch
        %154 = sbr.rel (%p152) target = $region24
      $region23: #{tpu_custom_call.1} parent=5 // pred_region
        // Predicated region
        $region25: #{tpu_custom_call.1} parent=23 // pred_check
          %p155 = pneg %p36
        $region26: #{tpu_custom_call.1} parent=23 // pred_check_branch
          %157 = sbr.rel (%p155) target = $region28
        $region27: #{tpu_custom_call.1} parent=23 // pred_region
          %s158 = sand.u32 %s26, 1
          %s159 = scalar_lea.sflag [#allocation3], %s158
          %s160 = sand.u32 %s26, 1
          %s161 = smul.addr %s160, 128
          %s162 = scalar_lea.vmem [#allocation2], %s161
          %s163 = smul.u32 16, %s16
          %165 = vsyncadd %s159, 0
          %s166 = smul.addr %s163, 8
          %s167 = scalar_lea.hbm %s0, %s166
          %s168 = sshll.u32 %s167, 4
          %s169 = int_to_ptr.hbm [resolvable:$true] %s168
          %s170 = sshll.u32 %s162, 4
          %s171 = int_to_ptr.vmem [resolvable:$true] %s170
          %176 = dma.hbm_to_vmem [thread:$0]  %s169, 2048, %s171, %s159, 128, 128, 8
        $region28: #{tpu_custom_call.1} parent=23 // pred_fallthru
          _
      $region24: #{tpu_custom_call.1} parent=5 // pred_fallthru
        _
      %p177 = scmp.le.s32.totalorder 1, %s16
      %p178 = scmp.lt.s32.totalorder %s16, 3
      %p179 = pnand %p177, %p178
      %p180 = pneg %p179
      // Predicated region
      $region29: #{tpu_custom_call.1} parent=5 // pred_check
        _
      $region30: #{tpu_custom_call.1} parent=5 // pred_check_branch
        %182 = sbr.rel (%p179) target = $region32
      $region31: #{tpu_custom_call.1} parent=5 // pred_region
        %s183 = ssub.s32 %s16, 1
        %s184 = sand.u32 %s29, 1
        %s185 = scalar_lea.sflag [#allocation3], %s184
        %s186 = sand.u32 %s29, 1
        %s187 = smul.addr %s186, 128
        %s188 = scalar_lea.vmem [#allocation2], %s187
        // Predicated region
        $region33: #{tpu_custom_call.1} parent=31 // pred_check
          %p189 = pneg %p42
        $region34: #{tpu_custom_call.1} parent=31 // pred_check_branch
          %191 = sbr.rel (%p189) target = $region36
        $region35: #{tpu_custom_call.1} parent=31 // pred_region
          %193 = dma.done %s185, 2048
        $region36: #{tpu_custom_call.1} parent=31 // pred_fallthru
          _
        // Predicated region
        $region37: #{tpu_custom_call.1} parent=31 // pred_check
          %p194 = pneg %p63
        $region38: #{tpu_custom_call.1} parent=31 // pred_check_branch
          %196 = sbr.rel (%p194) target = $region40
        $region39: #{tpu_custom_call.1} parent=31 // pred_region
          %198 = dma.done [#allocation6], 8192
        $region40: #{tpu_custom_call.1} parent=31 // pred_fallthru
          _
        // Predicated region
        $region41: #{tpu_custom_call.1} parent=31 // pred_check
          %p199 = pneg %p84
        $region42: #{tpu_custom_call.1} parent=31 // pred_check_branch
          %201 = sbr.rel (%p199) target = $region44
        $region43: #{tpu_custom_call.1} parent=31 // pred_region
          %203 = dma.done [#allocation6], 64
        $region44: #{tpu_custom_call.1} parent=31 // pred_fallthru
          _
        %s204 = sand.u32 %s29, 1
        %s205 = scalar_lea.sflag [#allocation3], %s204
        %s206 = sand.u32 %s29, 1
        %s207 = smul.addr %s206, 128
        %s208 = scalar_lea.vmem [#allocation2], %s207
        %p209 = pneg %p42
        %p210 = pneg %p39
        %p211 = pneg %p63
        %p212 = pneg %p60
        %p213 = pneg %p84
        %p214 = pneg %p81
        %p215 = pneg %p110
        %p216 = pneg %p107
        %s217 = sand.u32 %s97, 1
        %s218 = scalar_lea.sflag [#allocation4], %s217
        %s219 = sand.u32 %s97, 1
        %s220 = smul.addr %s219, 128
        %s221 = scalar_lea.vmem [#allocation8], %s220
        %s222 = smul.u32 16, %s21
        %s223 = smul.u32 16, %s21
        %v224 = vld [vmem:[%s188] sm:$0xff]
        %v225 = vld [vmem:[%s188 + $0x8] sm:$0xff]
        %v226 = vld [vmem:[%s188 + $0x10] sm:$0xff]
        %v227 = vld [vmem:[%s188 + $0x18] sm:$0xff]
        %v228 = vld [vmem:[%s188 + $0x20] sm:$0xff]
        %v229 = vld [vmem:[%s188 + $0x28] sm:$0xff]
        %v230 = vld [vmem:[%s188 + $0x30] sm:$0xff]
        %v231 = vld [vmem:[%s188 + $0x38] sm:$0xff]
        %v232 = vld [vmem:[%s188 + $0x40] sm:$0xff]
        %v233 = vld [vmem:[%s188 + $0x48] sm:$0xff]
        %v234 = vld [vmem:[%s188 + $0x50] sm:$0xff]
        %v235 = vld [vmem:[%s188 + $0x58] sm:$0xff]
        %v236 = vld [vmem:[%s188 + $0x60] sm:$0xff]
        %v237 = vld [vmem:[%s188 + $0x68] sm:$0xff]
        %v238 = vld [vmem:[%s188 + $0x70] sm:$0xff]
        %v239 = vld [vmem:[%s188 + $0x78] sm:$0xff]
        %v240 = vmul.f32 %v224, %v224
        %v241 = vmul.f32 %v225, %v225
        %v242 = vmul.f32 %v226, %v226
        %v243 = vmul.f32 %v227, %v227
        %v244 = vmul.f32 %v228, %v228
        %v245 = vmul.f32 %v229, %v229
        %v246 = vmul.f32 %v230, %v230
        %v247 = vmul.f32 %v231, %v231
        %v248 = vmul.f32 %v232, %v232
        %v249 = vmul.f32 %v233, %v233
        %v250 = vmul.f32 %v234, %v234
        %v251 = vmul.f32 %v235, %v235
        %v252 = vmul.f32 %v236, %v236
        %v253 = vmul.f32 %v237, %v237
        %v254 = vmul.f32 %v238, %v238
        %v255 = vmul.f32 %v239, %v239
        %256 = vadd.xlane.f32.xlu0 %v240
        %v257 = vpop.xlane.xlu0 %256
        %258 = vadd.xlane.f32.xlu0 %v241
        %v259 = vpop.xlane.xlu0 %258
        %260 = vadd.xlane.f32.xlu0 %v242
        %v261 = vpop.xlane.xlu0 %260
        %262 = vadd.xlane.f32.xlu0 %v243
        %v263 = vpop.xlane.xlu0 %262
        %264 = vadd.xlane.f32.xlu0 %v244
        %v265 = vpop.xlane.xlu0 %264
        %266 = vadd.xlane.f32.xlu0 %v245
        %v267 = vpop.xlane.xlu0 %266
        %268 = vadd.xlane.f32.xlu0 %v246
        %v269 = vpop.xlane.xlu0 %268
        %270 = vadd.xlane.f32.xlu0 %v247
        %v271 = vpop.xlane.xlu0 %270
        %272 = vadd.xlane.f32.xlu0 %v248
        %v273 = vpop.xlane.xlu0 %272
        %274 = vadd.xlane.f32.xlu0 %v249
        %v275 = vpop.xlane.xlu0 %274
        %276 = vadd.xlane.f32.xlu0 %v250
        %v277 = vpop.xlane.xlu0 %276
        %278 = vadd.xlane.f32.xlu0 %v251
        %v279 = vpop.xlane.xlu0 %278
        %280 = vadd.xlane.f32.xlu0 %v252
        %v281 = vpop.xlane.xlu0 %280
        %282 = vadd.xlane.f32.xlu0 %v253
        %v283 = vpop.xlane.xlu0 %282
        %284 = vadd.xlane.f32.xlu0 %v254
        %v285 = vpop.xlane.xlu0 %284
        %286 = vadd.xlane.f32.xlu0 %v255
        %v287 = vpop.xlane.xlu0 %286
        %v288 = vrsqrt.pop %v257
        %v289 = vmul.f32 %v288, %v257
        %v290 = vmul.f32 %v289, %v288
        %v291 = vmul.f32 0.5, %v290
        %v292 = vsub.f32 1.5, %v291
        %v293 = vmul.f32 %v288, %v292
        %v294 = vmul.f32 %v257, %v293
        %vm295 = vcmp.eq.f32.partialorder %v257, inf
        %v296 = vsel %vm295, %v257, %v294
        %vm297 = vcmp.eq.f32.partialorder %v257, 0.0
        %v298 = vand.u32 %v257, 2147483648
        %v299 = vsel %vm297, %v298, %v296
        %v300 = vrsqrt.pop %v259
        %v301 = vmul.f32 %v300, %v259
        %v302 = vmul.f32 %v301, %v300
        %v303 = vmul.f32 0.5, %v302
        %v304 = vsub.f32 1.5, %v303
        %v305 = vmul.f32 %v300, %v304
        %v306 = vmul.f32 %v259, %v305
        %vm307 = vcmp.eq.f32.partialorder %v259, inf
        %v308 = vsel %vm307, %v259, %v306
        %vm309 = vcmp.eq.f32.partialorder %v259, 0.0
        %v310 = vand.u32 %v259, 2147483648
        %v311 = vsel %vm309, %v310, %v308
        %v312 = vrsqrt.pop %v261
        %v313 = vmul.f32 %v312, %v261
        %v314 = vmul.f32 %v313, %v312
        %v315 = vmul.f32 0.5, %v314
        %v316 = vsub.f32 1.5, %v315
        %v317 = vmul.f32 %v312, %v316
        %v318 = vmul.f32 %v261, %v317
        %vm319 = vcmp.eq.f32.partialorder %v261, inf
        %v320 = vsel %vm319, %v261, %v318
        %vm321 = vcmp.eq.f32.partialorder %v261, 0.0
        %v322 = vand.u32 %v261, 2147483648
        %v323 = vsel %vm321, %v322, %v320
        %v324 = vrsqrt.pop %v263
        %v325 = vmul.f32 %v324, %v263
        %v326 = vmul.f32 %v325, %v324
        %v327 = vmul.f32 0.5, %v326
        %v328 = vsub.f32 1.5, %v327
        %v329 = vmul.f32 %v324, %v328
        %v330 = vmul.f32 %v263, %v329
        %vm331 = vcmp.eq.f32.partialorder %v263, inf
        %v332 = vsel %vm331, %v263, %v330
        %vm333 = vcmp.eq.f32.partialorder %v263, 0.0
        %v334 = vand.u32 %v263, 2147483648
        %v335 = vsel %vm333, %v334, %v332
        %v336 = vrsqrt.pop %v265
        %v337 = vmul.f32 %v336, %v265
        %v338 = vmul.f32 %v337, %v336
        %v339 = vmul.f32 0.5, %v338
        %v340 = vsub.f32 1.5, %v339
        %v341 = vmul.f32 %v336, %v340
        %v342 = vmul.f32 %v265, %v341
        %vm343 = vcmp.eq.f32.partialorder %v265, inf
        %v344 = vsel %vm343, %v265, %v342
        %vm345 = vcmp.eq.f32.partialorder %v265, 0.0
        %v346 = vand.u32 %v265, 2147483648
        %v347 = vsel %vm345, %v346, %v344
        %v348 = vrsqrt.pop %v267
        %v349 = vmul.f32 %v348, %v267
        %v350 = vmul.f32 %v349, %v348
        %v351 = vmul.f32 0.5, %v350
        %v352 = vsub.f32 1.5, %v351
        %v353 = vmul.f32 %v348, %v352
        %v354 = vmul.f32 %v267, %v353
        %vm355 = vcmp.eq.f32.partialorder %v267, inf
        %v356 = vsel %vm355, %v267, %v354
        %vm357 = vcmp.eq.f32.partialorder %v267, 0.0
        %v358 = vand.u32 %v267, 2147483648
        %v359 = vsel %vm357, %v358, %v356
        %v360 = vrsqrt.pop %v269
        %v361 = vmul.f32 %v360, %v269
        %v362 = vmul.f32 %v361, %v360
        %v363 = vmul.f32 0.5, %v362
        %v364 = vsub.f32 1.5, %v363
        %v365 = vmul.f32 %v360, %v364
        %v366 = vmul.f32 %v269, %v365
        %vm367 = vcmp.eq.f32.partialorder %v269, inf
        %v368 = vsel %vm367, %v269, %v366
        %vm369 = vcmp.eq.f32.partialorder %v269, 0.0
        %v370 = vand.u32 %v269, 2147483648
        %v371 = vsel %vm369, %v370, %v368
        %v372 = vrsqrt.pop %v271
        %v373 = vmul.f32 %v372, %v271
        %v374 = vmul.f32 %v373, %v372
        %v375 = vmul.f32 0.5, %v374
        %v376 = vsub.f32 1.5, %v375
        %v377 = vmul.f32 %v372, %v376
        %v378 = vmul.f32 %v271, %v377
        %vm379 = vcmp.eq.f32.partialorder %v271, inf
        %v380 = vsel %vm379, %v271, %v378
        %vm381 = vcmp.eq.f32.partialorder %v271, 0.0
        %v382 = vand.u32 %v271, 2147483648
        %v383 = vsel %vm381, %v382, %v380
        %v384 = vrsqrt.pop %v273
        %v385 = vmul.f32 %v384, %v273
        %v386 = vmul.f32 %v385, %v384
        %v387 = vmul.f32 0.5, %v386
        %v388 = vsub.f32 1.5, %v387
        %v389 = vmul.f32 %v384, %v388
        %v390 = vmul.f32 %v273, %v389
        %vm391 = vcmp.eq.f32.partialorder %v273, inf
        %v392 = vsel %vm391, %v273, %v390
        %vm393 = vcmp.eq.f32.partialorder %v273, 0.0
        %v394 = vand.u32 %v273, 2147483648
        %v395 = vsel %vm393, %v394, %v392
        %v396 = vrsqrt.pop %v275
        %v397 = vmul.f32 %v396, %v275
        %v398 = vmul.f32 %v397, %v396
        %v399 = vmul.f32 0.5, %v398
        %v400 = vsub.f32 1.5, %v399
        %v401 = vmul.f32 %v396, %v400
        %v402 = vmul.f32 %v275, %v401
        %vm403 = vcmp.eq.f32.partialorder %v275, inf
        %v404 = vsel %vm403, %v275, %v402
        %vm405 = vcmp.eq.f32.partialorder %v275, 0.0
        %v406 = vand.u32 %v275, 2147483648
        %v407 = vsel %vm405, %v406, %v404
        %v408 = vrsqrt.pop %v277
        %v409 = vmul.f32 %v408, %v277
        %v410 = vmul.f32 %v409, %v408
        %v411 = vmul.f32 0.5, %v410
        %v412 = vsub.f32 1.5, %v411
        %v413 = vmul.f32 %v408, %v412
        %v414 = vmul.f32 %v277, %v413
        %vm415 = vcmp.eq.f32.partialorder %v277, inf
        %v416 = vsel %vm415, %v277, %v414
        %vm417 = vcmp.eq.f32.partialorder %v277, 0.0
        %v418 = vand.u32 %v277, 2147483648
        %v419 = vsel %vm417, %v418, %v416
        %v420 = vrsqrt.pop %v279
        %v421 = vmul.f32 %v420, %v279
        %v422 = vmul.f32 %v421, %v420
        %v423 = vmul.f32 0.5, %v422
        %v424 = vsub.f32 1.5, %v423
        %v425 = vmul.f32 %v420, %v424
        %v426 = vmul.f32 %v279, %v425
        %vm427 = vcmp.eq.f32.partialorder %v279, inf
        %v428 = vsel %vm427, %v279, %v426
        %vm429 = vcmp.eq.f32.partialorder %v279, 0.0
        %v430 = vand.u32 %v279, 2147483648
        %v431 = vsel %vm429, %v430, %v428
        %v432 = vrsqrt.pop %v281
        %v433 = vmul.f32 %v432, %v281
        %v434 = vmul.f32 %v433, %v432
        %v435 = vmul.f32 0.5, %v434
        %v436 = vsub.f32 1.5, %v435
        %v437 = vmul.f32 %v432, %v436
        %v438 = vmul.f32 %v281, %v437
        %vm439 = vcmp.eq.f32.partialorder %v281, inf
        %v440 = vsel %vm439, %v281, %v438
        %vm441 = vcmp.eq.f32.partialorder %v281, 0.0
        %v442 = vand.u32 %v281, 2147483648
        %v443 = vsel %vm441, %v442, %v440
        %v444 = vrsqrt.pop %v283
        %v445 = vmul.f32 %v444, %v283
        %v446 = vmul.f32 %v445, %v444
        %v447 = vmul.f32 0.5, %v446
        %v448 = vsub.f32 1.5, %v447
        %v449 = vmul.f32 %v444, %v448
        %v450 = vmul.f32 %v283, %v449
        %vm451 = vcmp.eq.f32.partialorder %v283, inf
        %v452 = vsel %vm451, %v283, %v450
        %vm453 = vcmp.eq.f32.partialorder %v283, 0.0
        %v454 = vand.u32 %v283, 2147483648
        %v455 = vsel %vm453, %v454, %v452
        %v456 = vrsqrt.pop %v285
        %v457 = vmul.f32 %v456, %v285
        %v458 = vmul.f32 %v457, %v456
        %v459 = vmul.f32 0.5, %v458
        %v460 = vsub.f32 1.5, %v459
        %v461 = vmul.f32 %v456, %v460
        %v462 = vmul.f32 %v285, %v461
        %vm463 = vcmp.eq.f32.partialorder %v285, inf
        %v464 = vsel %vm463, %v285, %v462
        %vm465 = vcmp.eq.f32.partialorder %v285, 0.0
        %v466 = vand.u32 %v285, 2147483648
        %v467 = vsel %vm465, %v466, %v464
        %v468 = vrsqrt.pop %v287
        %v469 = vmul.f32 %v468, %v287
        %v470 = vmul.f32 %v469, %v468
        %v471 = vmul.f32 0.5, %v470
        %v472 = vsub.f32 1.5, %v471
        %v473 = vmul.f32 %v468, %v472
        %v474 = vmul.f32 %v287, %v473
        %vm475 = vcmp.eq.f32.partialorder %v287, inf
        %v476 = vsel %vm475, %v287, %v474
        %vm477 = vcmp.eq.f32.partialorder %v287, 0.0
        %v478 = vand.u32 %v287, 2147483648
        %v479 = vsel %vm477, %v478, %v476
        %v480 = vmax.f32 %v299, 1e-12
        %v481 = vmax.f32 %v311, 1e-12
        %v482 = vmax.f32 %v323, 1e-12
        %v483 = vmax.f32 %v335, 1e-12
        %v484 = vmax.f32 %v347, 1e-12
        %v485 = vmax.f32 %v359, 1e-12
        %v486 = vmax.f32 %v371, 1e-12
        %v487 = vmax.f32 %v383, 1e-12
        %v488 = vmax.f32 %v395, 1e-12
        %v489 = vmax.f32 %v407, 1e-12
        %v490 = vmax.f32 %v419, 1e-12
        %v491 = vmax.f32 %v431, 1e-12
        %v492 = vmax.f32 %v443, 1e-12
        %v493 = vmax.f32 %v455, 1e-12
        %v494 = vmax.f32 %v467, 1e-12
        %v495 = vmax.f32 %v479, 1e-12
        %v496 = vrcp.pop %v480
        %v497 = vmul.f32 %v480, %v496
        %v498 = vsub.f32 1.0, %v497
        %v499 = vmul.f32 %v496, %v498
        %v500 = vadd.f32 %v496, %v499
        %vm501 = vweird.f32 %v480
        %vm502 = vweird.f32 %v496
        %vm503 = vmor %vm501, %vm502
        %v504 = vsel %vm503, %v496, %v500
        %v505 = vand.u32 2147483647, %v480
        %vm506 = vcmp.eq.f32.partialorder %v505, 8.507059e+37
        %v507 = vand.u32 %v480, 2147483648
        %v508 = vor.u32 1.1754944e-38, %v507
        %v509 = vsel %vm506, %v508, %v504
        %v510 = vmul.f32 %v224, %v509
        %v511 = vrcp.pop %v481
        %v512 = vmul.f32 %v481, %v511
        %v513 = vsub.f32 1.0, %v512
        %v514 = vmul.f32 %v511, %v513
        %v515 = vadd.f32 %v511, %v514
        %vm516 = vweird.f32 %v481
        %vm517 = vweird.f32 %v511
        %vm518 = vmor %vm516, %vm517
        %v519 = vsel %vm518, %v511, %v515
        %v520 = vand.u32 2147483647, %v481
        %vm521 = vcmp.eq.f32.partialorder %v520, 8.507059e+37
        %v522 = vand.u32 %v481, 2147483648
        %v523 = vor.u32 1.1754944e-38, %v522
        %v524 = vsel %vm521, %v523, %v519
        %v525 = vmul.f32 %v225, %v524
        %v526 = vrcp.pop %v482
        %v527 = vmul.f32 %v482, %v526
        %v528 = vsub.f32 1.0, %v527
        %v529 = vmul.f32 %v526, %v528
        %v530 = vadd.f32 %v526, %v529
        %vm531 = vweird.f32 %v482
        %vm532 = vweird.f32 %v526
        %vm533 = vmor %vm531, %vm532
        %v534 = vsel %vm533, %v526, %v530
        %v535 = vand.u32 2147483647, %v482
        %vm536 = vcmp.eq.f32.partialorder %v535, 8.507059e+37
        %v537 = vand.u32 %v482, 2147483648
        %v538 = vor.u32 1.1754944e-38, %v537
        %v539 = vsel %vm536, %v538, %v534
        %v540 = vmul.f32 %v226, %v539
        %v541 = vrcp.pop %v483
        %v542 = vmul.f32 %v483, %v541
        %v543 = vsub.f32 1.0, %v542
        %v544 = vmul.f32 %v541, %v543
        %v545 = vadd.f32 %v541, %v544
        %vm546 = vweird.f32 %v483
        %vm547 = vweird.f32 %v541
        %vm548 = vmor %vm546, %vm547
        %v549 = vsel %vm548, %v541, %v545
        %v550 = vand.u32 2147483647, %v483
        %vm551 = vcmp.eq.f32.partialorder %v550, 8.507059e+37
        %v552 = vand.u32 %v483, 2147483648
        %v553 = vor.u32 1.1754944e-38, %v552
        %v554 = vsel %vm551, %v553, %v549
        %v555 = vmul.f32 %v227, %v554
        %v556 = vrcp.pop %v484
        %v557 = vmul.f32 %v484, %v556
        %v558 = vsub.f32 1.0, %v557
        %v559 = vmul.f32 %v556, %v558
        %v560 = vadd.f32 %v556, %v559
        %vm561 = vweird.f32 %v484
        %vm562 = vweird.f32 %v556
        %vm563 = vmor %vm561, %vm562
        %v564 = vsel %vm563, %v556, %v560
        %v565 = vand.u32 2147483647, %v484
        %vm566 = vcmp.eq.f32.partialorder %v565, 8.507059e+37
        %v567 = vand.u32 %v484, 2147483648
        %v568 = vor.u32 1.1754944e-38, %v567
        %v569 = vsel %vm566, %v568, %v564
        %v570 = vmul.f32 %v228, %v569
        %v571 = vrcp.pop %v485
        %v572 = vmul.f32 %v485, %v571
        %v573 = vsub.f32 1.0, %v572
        %v574 = vmul.f32 %v571, %v573
        %v575 = vadd.f32 %v571, %v574
        %vm576 = vweird.f32 %v485
        %vm577 = vweird.f32 %v571
        %vm578 = vmor %vm576, %vm577
        %v579 = vsel %vm578, %v571, %v575
        %v580 = vand.u32 2147483647, %v485
        %vm581 = vcmp.eq.f32.partialorder %v580, 8.507059e+37
        %v582 = vand.u32 %v485, 2147483648
        %v583 = vor.u32 1.1754944e-38, %v582
        %v584 = vsel %vm581, %v583, %v579
        %v585 = vmul.f32 %v229, %v584
        %v586 = vrcp.pop %v486
        %v587 = vmul.f32 %v486, %v586
        %v588 = vsub.f32 1.0, %v587
        %v589 = vmul.f32 %v586, %v588
        %v590 = vadd.f32 %v586, %v589
        %vm591 = vweird.f32 %v486
        %vm592 = vweird.f32 %v586
        %vm593 = vmor %vm591, %vm592
        %v594 = vsel %vm593, %v586, %v590
        %v595 = vand.u32 2147483647, %v486
        %vm596 = vcmp.eq.f32.partialorder %v595, 8.507059e+37
        %v597 = vand.u32 %v486, 2147483648
        %v598 = vor.u32 1.1754944e-38, %v597
        %v599 = vsel %vm596, %v598, %v594
        %v600 = vmul.f32 %v230, %v599
        %v601 = vrcp.pop %v487
        %v602 = vmul.f32 %v487, %v601
        %v603 = vsub.f32 1.0, %v602
        %v604 = vmul.f32 %v601, %v603
        %v605 = vadd.f32 %v601, %v604
        %vm606 = vweird.f32 %v487
        %vm607 = vweird.f32 %v601
        %vm608 = vmor %vm606, %vm607
        %v609 = vsel %vm608, %v601, %v605
        %v610 = vand.u32 2147483647, %v487
        %vm611 = vcmp.eq.f32.partialorder %v610, 8.507059e+37
        %v612 = vand.u32 %v487, 2147483648
        %v613 = vor.u32 1.1754944e-38, %v612
        %v614 = vsel %vm611, %v613, %v609
        %v615 = vmul.f32 %v231, %v614
        %v616 = vrcp.pop %v488
        %v617 = vmul.f32 %v488, %v616
        %v618 = vsub.f32 1.0, %v617
        %v619 = vmul.f32 %v616, %v618
        %v620 = vadd.f32 %v616, %v619
        %vm621 = vweird.f32 %v488
        %vm622 = vweird.f32 %v616
        %vm623 = vmor %vm621, %vm622
        %v624 = vsel %vm623, %v616, %v620
        %v625 = vand.u32 2147483647, %v488
        %vm626 = vcmp.eq.f32.partialorder %v625, 8.507059e+37
        %v627 = vand.u32 %v488, 2147483648
        %v628 = vor.u32 1.1754944e-38, %v627
        %v629 = vsel %vm626, %v628, %v624
        %v630 = vmul.f32 %v232, %v629
        %v631 = vrcp.pop %v489
        %v632 = vmul.f32 %v489, %v631
        %v633 = vsub.f32 1.0, %v632
        %v634 = vmul.f32 %v631, %v633
        %v635 = vadd.f32 %v631, %v634
        %vm636 = vweird.f32 %v489
        %vm637 = vweird.f32 %v631
        %vm638 = vmor %vm636, %vm637
        %v639 = vsel %vm638, %v631, %v635
        %v640 = vand.u32 2147483647, %v489
        %vm641 = vcmp.eq.f32.partialorder %v640, 8.507059e+37
        %v642 = vand.u32 %v489, 2147483648
        %v643 = vor.u32 1.1754944e-38, %v642
        %v644 = vsel %vm641, %v643, %v639
        %v645 = vmul.f32 %v233, %v644
        %v646 = vrcp.pop %v490
        %v647 = vmul.f32 %v490, %v646
        %v648 = vsub.f32 1.0, %v647
        %v649 = vmul.f32 %v646, %v648
        %v650 = vadd.f32 %v646, %v649
        %vm651 = vweird.f32 %v490
        %vm652 = vweird.f32 %v646
        %vm653 = vmor %vm651, %vm652
        %v654 = vsel %vm653, %v646, %v650
        %v655 = vand.u32 2147483647, %v490
        %vm656 = vcmp.eq.f32.partialorder %v655, 8.507059e+37
        %v657 = vand.u32 %v490, 2147483648
        %v658 = vor.u32 1.1754944e-38, %v657
        %v659 = vsel %vm656, %v658, %v654
        %v660 = vmul.f32 %v234, %v659
        %v661 = vrcp.pop %v491
        %v662 = vmul.f32 %v491, %v661
        %v663 = vsub.f32 1.0, %v662
        %v664 = vmul.f32 %v661, %v663
        %v665 = vadd.f32 %v661, %v664
        %vm666 = vweird.f32 %v491
        %vm667 = vweird.f32 %v661
        %vm668 = vmor %vm666, %vm667
        %v669 = vsel %vm668, %v661, %v665
        %v670 = vand.u32 2147483647, %v491
        %vm671 = vcmp.eq.f32.partialorder %v670, 8.507059e+37
        %v672 = vand.u32 %v491, 2147483648
        %v673 = vor.u32 1.1754944e-38, %v672
        %v674 = vsel %vm671, %v673, %v669
        %v675 = vmul.f32 %v235, %v674
        %v676 = vrcp.pop %v492
        %v677 = vmul.f32 %v492, %v676
        %v678 = vsub.f32 1.0, %v677
        %v679 = vmul.f32 %v676, %v678
        %v680 = vadd.f32 %v676, %v679
        %vm681 = vweird.f32 %v492
        %vm682 = vweird.f32 %v676
        %vm683 = vmor %vm681, %vm682
        %v684 = vsel %vm683, %v676, %v680
        %v685 = vand.u32 2147483647, %v492
        %vm686 = vcmp.eq.f32.partialorder %v685, 8.507059e+37
        %v687 = vand.u32 %v492, 2147483648
        %v688 = vor.u32 1.1754944e-38, %v687
        %v689 = vsel %vm686, %v688, %v684
        %v690 = vmul.f32 %v236, %v689
        %v691 = vrcp.pop %v493
        %v692 = vmul.f32 %v493, %v691
        %v693 = vsub.f32 1.0, %v692
        %v694 = vmul.f32 %v691, %v693
        %v695 = vadd.f32 %v691, %v694
        %vm696 = vweird.f32 %v493
        %vm697 = vweird.f32 %v691
        %vm698 = vmor %vm696, %vm697
        %v699 = vsel %vm698, %v691, %v695
        %v700 = vand.u32 2147483647, %v493
        %vm701 = vcmp.eq.f32.partialorder %v700, 8.507059e+37
        %v702 = vand.u32 %v493, 2147483648
        %v703 = vor.u32 1.1754944e-38, %v702
        %v704 = vsel %vm701, %v703, %v699
        %v705 = vmul.f32 %v237, %v704
        %v706 = vrcp.pop %v494
        %v707 = vmul.f32 %v494, %v706
        %v708 = vsub.f32 1.0, %v707
        %v709 = vmul.f32 %v706, %v708
        %v710 = vadd.f32 %v706, %v709
        %vm711 = vweird.f32 %v494
        %vm712 = vweird.f32 %v706
        %vm713 = vmor %vm711, %vm712
        %v714 = vsel %vm713, %v706, %v710
        %v715 = vand.u32 2147483647, %v494
        %vm716 = vcmp.eq.f32.partialorder %v715, 8.507059e+37
        %v717 = vand.u32 %v494, 2147483648
        %v718 = vor.u32 1.1754944e-38, %v717
        %v719 = vsel %vm716, %v718, %v714
        %v720 = vmul.f32 %v238, %v719
        %v721 = vrcp.pop %v495
        %v722 = vmul.f32 %v495, %v721
        %v723 = vsub.f32 1.0, %v722
        %v724 = vmul.f32 %v721, %v723
        %v725 = vadd.f32 %v721, %v724
        %vm726 = vweird.f32 %v495
        %vm727 = vweird.f32 %v721
        %vm728 = vmor %vm726, %vm727
        %v729 = vsel %vm728, %v721, %v725
        %v730 = vand.u32 2147483647, %v495
        %vm731 = vcmp.eq.f32.partialorder %v730, 8.507059e+37
        %v732 = vand.u32 %v495, 2147483648
        %v733 = vor.u32 1.1754944e-38, %v732
        %v734 = vsel %vm731, %v733, %v729
        %v735 = vmul.f32 %v239, %v734
        %v736 = vld [vmem:[#allocation7] sm:$0xf]
        %v737 = vld [vmem:[#allocation5] sm:$0xff]
        %v738 = vld [vmem:[#allocation5 + $0x8] sm:$0xff]
        %v739 = vld [vmem:[#allocation5 + $0x10] sm:$0xff]
        %v740 = vld [vmem:[#allocation5 + $0x18] sm:$0xff]
        %v741 = vld [vmem:[#allocation5 + $0x20] sm:$0xff]
        %v742 = vld [vmem:[#allocation5 + $0x28] sm:$0xff]
        %v743 = vld [vmem:[#allocation5 + $0x30] sm:$0xff]
        %v744 = vld [vmem:[#allocation5 + $0x38] sm:$0xff]
        %v745 = vld [vmem:[#allocation5 + $0x40] sm:$0xff]
        %v746 = vld [vmem:[#allocation5 + $0x48] sm:$0xff]
        %v747 = vld [vmem:[#allocation5 + $0x50] sm:$0xff]
        %v748 = vld [vmem:[#allocation5 + $0x58] sm:$0xff]
        %v749 = vld [vmem:[#allocation5 + $0x60] sm:$0xff]
        %v750 = vld [vmem:[#allocation5 + $0x68] sm:$0xff]
        %v751 = vld [vmem:[#allocation5 + $0x70] sm:$0xff]
        %v752 = vld [vmem:[#allocation5 + $0x78] sm:$0xff]
        %v753 = vperm.slane %v736, 0
        %754 = vmatpush.msra.mxu0 %v752
        %755 = vmatpush.msra.mxu0 %v751
        %756 = vmatpush.msra.mxu0 %v750
        %757 = vmatpush.msra.mxu0 %v749
        %758 = vmatpush.msra.mxu0 %v748
        %759 = vmatpush.msra.mxu0 %v747
        %760 = vmatpush.msra.mxu0 %v746
        %761 = vmatpush.msra.mxu0 %v745
        %762 = vmatpush.msra.mxu0 %v744
        %763 = vmatpush.msra.mxu0 %v743
        %764 = vmatpush.msra.mxu0 %v742
        %765 = vmatpush.msra.mxu0 %v741
        %766 = vmatpush.msra.mxu0 %v740
        %767 = vmatpush.msra.mxu0 %v739
        %768 = vmatpush.msra.mxu0 %v738
        %769 = vmatpush.msra.mxu0 %v737
        %770 = vmatmul.f32.gmra.mxu0 %v510
        %v771 = vpop.f32.mrf.mxu0
        %v772 = vadd.f32 %v753, %v771
        %773 = vmatmul.f32.gmra.mxu0 %v525
        %v774 = vpop.f32.mrf.mxu0
        %v775 = vadd.f32 %v753, %v774
        %776 = vmatmul.f32.gmra.mxu0 %v540
        %v777 = vpop.f32.mrf.mxu0
        %v778 = vadd.f32 %v753, %v777
        %779 = vmatmul.f32.gmra.mxu0 %v555
        %v780 = vpop.f32.mrf.mxu0
        %v781 = vadd.f32 %v753, %v780
        %782 = vmatmul.f32.gmra.mxu0 %v570
        %v783 = vpop.f32.mrf.mxu0
        %v784 = vadd.f32 %v753, %v783
        %785 = vmatmul.f32.gmra.mxu0 %v585
        %v786 = vpop.f32.mrf.mxu0
        %v787 = vadd.f32 %v753, %v786
        %788 = vmatmul.f32.gmra.mxu0 %v600
        %v789 = vpop.f32.mrf.mxu0
        %v790 = vadd.f32 %v753, %v789
        %791 = vmatmul.f32.gmra.mxu0 %v615
        %v792 = vpop.f32.mrf.mxu0
        %v793 = vadd.f32 %v753, %v792
        %794 = vmatmul.f32.gmra.mxu0 %v630
        %v795 = vpop.f32.mrf.mxu0
        %v796 = vadd.f32 %v753, %v795
        %797 = vmatmul.f32.gmra.mxu0 %v645
        %v798 = vpop.f32.mrf.mxu0
        %v799 = vadd.f32 %v753, %v798
        %800 = vmatmul.f32.gmra.mxu0 %v660
        %v801 = vpop.f32.mrf.mxu0
        %v802 = vadd.f32 %v753, %v801
        %803 = vmatmul.f32.gmra.mxu0 %v675
        %v804 = vpop.f32.mrf.mxu0
        %v805 = vadd.f32 %v753, %v804
        %806 = vmatmul.f32.gmra.mxu0 %v690
        %v807 = vpop.f32.mrf.mxu0
        %v808 = vadd.f32 %v753, %v807
        %809 = vmatmul.f32.gmra.mxu0 %v705
        %v810 = vpop.f32.mrf.mxu0
        %v811 = vadd.f32 %v753, %v810
        %812 = vmatmul.f32.gmra.mxu0 %v720
        %v813 = vpop.f32.mrf.mxu0
        %v814 = vadd.f32 %v753, %v813
        %815 = vmatmul.f32.gmra.mxu0 %v735
        %v816 = vpop.f32.mrf.mxu0
        %v817 = vadd.f32 %v753, %v816
        %818 = vdwg.mxu0
        %v819 = vmul.f32 %v772, 0.2
        %v820 = vmul.f32 %v775, 0.2
        %v821 = vmul.f32 %v778, 0.2
        %v822 = vmul.f32 %v781, 0.2
        %v823 = vmul.f32 %v784, 0.2
        %v824 = vmul.f32 %v787, 0.2
        %v825 = vmul.f32 %v790, 0.2
        %v826 = vmul.f32 %v793, 0.2
        %v827 = vmul.f32 %v796, 0.2
        %v828 = vmul.f32 %v799, 0.2
        %v829 = vmul.f32 %v802, 0.2
        %v830 = vmul.f32 %v805, 0.2
        %v831 = vmul.f32 %v808, 0.2
        %v832 = vmul.f32 %v811, 0.2
        %v833 = vmul.f32 %v814, 0.2
        %v834 = vmul.f32 %v817, 0.2
        %v835 = vmax.f32 %v772, %v819
        %v836 = vmax.f32 %v775, %v820
        %v837 = vmax.f32 %v778, %v821
        %v838 = vmax.f32 %v781, %v822
        %v839 = vmax.f32 %v784, %v823
        %v840 = vmax.f32 %v787, %v824
        %v841 = vmax.f32 %v790, %v825
        %v842 = vmax.f32 %v793, %v826
        %v843 = vmax.f32 %v796, %v827
        %v844 = vmax.f32 %v799, %v828
        %v845 = vmax.f32 %v802, %v829
        %v846 = vmax.f32 %v805, %v830
        %v847 = vmax.f32 %v808, %v831
        %v848 = vmax.f32 %v811, %v832
        %v849 = vmax.f32 %v814, %v833
        %v850 = vmax.f32 %v817, %v834
        %s851 = scalar_lea.vmem [#allocation5], 128
        %v852 = vld [vmem:[%s851] sm:$0xff]
        %v853 = vld [vmem:[%s851 + $0x8] sm:$0xff]
        %v854 = vld [vmem:[%s851 + $0x10] sm:$0xff]
        %v855 = vld [vmem:[%s851 + $0x18] sm:$0xff]
        %v856 = vld [vmem:[%s851 + $0x20] sm:$0xff]
        %v857 = vld [vmem:[%s851 + $0x28] sm:$0xff]
        %v858 = vld [vmem:[%s851 + $0x30] sm:$0xff]
        %v859 = vld [vmem:[%s851 + $0x38] sm:$0xff]
        %v860 = vld [vmem:[%s851 + $0x40] sm:$0xff]
        %v861 = vld [vmem:[%s851 + $0x48] sm:$0xff]
        %v862 = vld [vmem:[%s851 + $0x50] sm:$0xff]
        %v863 = vld [vmem:[%s851 + $0x58] sm:$0xff]
        %v864 = vld [vmem:[%s851 + $0x60] sm:$0xff]
        %v865 = vld [vmem:[%s851 + $0x68] sm:$0xff]
        %v866 = vld [vmem:[%s851 + $0x70] sm:$0xff]
        %v867 = vld [vmem:[%s851 + $0x78] sm:$0xff]
        %v868 = vperm.slane %v736, 1
        %869 = vmatpush.msra.mxu0 %v867
        %870 = vmatpush.msra.mxu0 %v866
        %871 = vmatpush.msra.mxu0 %v865
        %872 = vmatpush.msra.mxu0 %v864
        %873 = vmatpush.msra.mxu0 %v863
        %874 = vmatpush.msra.mxu0 %v862
        %875 = vmatpush.msra.mxu0 %v861
        %876 = vmatpush.msra.mxu0 %v860
        %877 = vmatpush.msra.mxu0 %v859
        %878 = vmatpush.msra.mxu0 %v858
        %879 = vmatpush.msra.mxu0 %v857
        %880 = vmatpush.msra.mxu0 %v856
        %881 = vmatpush.msra.mxu0 %v855
        %882 = vmatpush.msra.mxu0 %v854
        %883 = vmatpush.msra.mxu0 %v853
        %884 = vmatpush.msra.mxu0 %v852
        %885 = vmatmul.f32.gmra.mxu0 %v835
        %v886 = vpop.f32.mrf.mxu0
        %v887 = vadd.f32 %v868, %v886
        %888 = vmatmul.f32.gmra.mxu0 %v836
        %v889 = vpop.f32.mrf.mxu0
        %v890 = vadd.f32 %v868, %v889
        %891 = vmatmul.f32.gmra.mxu0 %v837
        %v892 = vpop.f32.mrf.mxu0
        %v893 = vadd.f32 %v868, %v892
        %894 = vmatmul.f32.gmra.mxu0 %v838
        %v895 = vpop.f32.mrf.mxu0
        %v896 = vadd.f32 %v868, %v895
        %897 = vmatmul.f32.gmra.mxu0 %v839
        %v898 = vpop.f32.mrf.mxu0
        %v899 = vadd.f32 %v868, %v898
        %900 = vmatmul.f32.gmra.mxu0 %v840
        %v901 = vpop.f32.mrf.mxu0
        %v902 = vadd.f32 %v868, %v901
        %903 = vmatmul.f32.gmra.mxu0 %v841
        %v904 = vpop.f32.mrf.mxu0
        %v905 = vadd.f32 %v868, %v904
        %906 = vmatmul.f32.gmra.mxu0 %v842
        %v907 = vpop.f32.mrf.mxu0
        %v908 = vadd.f32 %v868, %v907
        %909 = vmatmul.f32.gmra.mxu0 %v843
        %v910 = vpop.f32.mrf.mxu0
        %v911 = vadd.f32 %v868, %v910
        %912 = vmatmul.f32.gmra.mxu0 %v844
        %v913 = vpop.f32.mrf.mxu0
        %v914 = vadd.f32 %v868, %v913
        %915 = vmatmul.f32.gmra.mxu0 %v845
        %v916 = vpop.f32.mrf.mxu0
        %v917 = vadd.f32 %v868, %v916
        %918 = vmatmul.f32.gmra.mxu0 %v846
        %v919 = vpop.f32.mrf.mxu0
        %v920 = vadd.f32 %v868, %v919
        %921 = vmatmul.f32.gmra.mxu0 %v847
        %v922 = vpop.f32.mrf.mxu0
        %v923 = vadd.f32 %v868, %v922
        %924 = vmatmul.f32.gmra.mxu0 %v848
        %v925 = vpop.f32.mrf.mxu0
        %v926 = vadd.f32 %v868, %v925
        %927 = vmatmul.f32.gmra.mxu0 %v849
        %v928 = vpop.f32.mrf.mxu0
        %v929 = vadd.f32 %v868, %v928
        %930 = vmatmul.f32.gmra.mxu0 %v850
        %v931 = vpop.f32.mrf.mxu0
        %v932 = vadd.f32 %v868, %v931
        %933 = vdwg.mxu0
        %v934 = vmul.f32 %v887, 0.2
        %v935 = vmul.f32 %v890, 0.2
        %v936 = vmul.f32 %v893, 0.2
        %v937 = vmul.f32 %v896, 0.2
        %v938 = vmul.f32 %v899, 0.2
        %v939 = vmul.f32 %v902, 0.2
        %v940 = vmul.f32 %v905, 0.2
        %v941 = vmul.f32 %v908, 0.2
        %v942 = vmul.f32 %v911, 0.2
        %v943 = vmul.f32 %v914, 0.2
        %v944 = vmul.f32 %v917, 0.2
        %v945 = vmul.f32 %v920, 0.2
        %v946 = vmul.f32 %v923, 0.2
        %v947 = vmul.f32 %v926, 0.2
        %v948 = vmul.f32 %v929, 0.2
        %v949 = vmul.f32 %v932, 0.2
        %v950 = vmax.f32 %v887, %v934
        %v951 = vmax.f32 %v890, %v935
        %v952 = vmax.f32 %v893, %v936
        %v953 = vmax.f32 %v896, %v937
        %v954 = vmax.f32 %v899, %v938
        %v955 = vmax.f32 %v902, %v939
        %v956 = vmax.f32 %v905, %v940
        %v957 = vmax.f32 %v908, %v941
        %v958 = vmax.f32 %v911, %v942
        %v959 = vmax.f32 %v914, %v943
        %v960 = vmax.f32 %v917, %v944
        %v961 = vmax.f32 %v920, %v945
        %v962 = vmax.f32 %v923, %v946
        %v963 = vmax.f32 %v926, %v947
        %v964 = vmax.f32 %v929, %v948
        %v965 = vmax.f32 %v932, %v949
        %s966 = scalar_lea.vmem [#allocation5], 256
        %v967 = vld [vmem:[%s966] sm:$0xff]
        %v968 = vld [vmem:[%s966 + $0x8] sm:$0xff]
        %v969 = vld [vmem:[%s966 + $0x10] sm:$0xff]
        %v970 = vld [vmem:[%s966 + $0x18] sm:$0xff]
        %v971 = vld [vmem:[%s966 + $0x20] sm:$0xff]
        %v972 = vld [vmem:[%s966 + $0x28] sm:$0xff]
        %v973 = vld [vmem:[%s966 + $0x30] sm:$0xff]
        %v974 = vld [vmem:[%s966 + $0x38] sm:$0xff]
        %v975 = vld [vmem:[%s966 + $0x40] sm:$0xff]
        %v976 = vld [vmem:[%s966 + $0x48] sm:$0xff]
        %v977 = vld [vmem:[%s966 + $0x50] sm:$0xff]
        %v978 = vld [vmem:[%s966 + $0x58] sm:$0xff]
        %v979 = vld [vmem:[%s966 + $0x60] sm:$0xff]
        %v980 = vld [vmem:[%s966 + $0x68] sm:$0xff]
        %v981 = vld [vmem:[%s966 + $0x70] sm:$0xff]
        %v982 = vld [vmem:[%s966 + $0x78] sm:$0xff]
        %v983 = vperm.slane %v736, 2
        %984 = vmatpush.msra.mxu0 %v982
        %985 = vmatpush.msra.mxu0 %v981
        %986 = vmatpush.msra.mxu0 %v980
        %987 = vmatpush.msra.mxu0 %v979
        %988 = vmatpush.msra.mxu0 %v978
        %989 = vmatpush.msra.mxu0 %v977
        %990 = vmatpush.msra.mxu0 %v976
        %991 = vmatpush.msra.mxu0 %v975
        %992 = vmatpush.msra.mxu0 %v974
        %993 = vmatpush.msra.mxu0 %v973
        %994 = vmatpush.msra.mxu0 %v972
        %995 = vmatpush.msra.mxu0 %v971
        %996 = vmatpush.msra.mxu0 %v970
        %997 = vmatpush.msra.mxu0 %v969
        %998 = vmatpush.msra.mxu0 %v968
        %999 = vmatpush.msra.mxu0 %v967
        %1000 = vmatmul.f32.gmra.mxu0 %v950
        %v1001 = vpop.f32.mrf.mxu0
        %v1002 = vadd.f32 %v983, %v1001
        %1003 = vmatmul.f32.gmra.mxu0 %v951
        %v1004 = vpop.f32.mrf.mxu0
        %v1005 = vadd.f32 %v983, %v1004
        %1006 = vmatmul.f32.gmra.mxu0 %v952
        %v1007 = vpop.f32.mrf.mxu0
        %v1008 = vadd.f32 %v983, %v1007
        %1009 = vmatmul.f32.gmra.mxu0 %v953
        %v1010 = vpop.f32.mrf.mxu0
        %v1011 = vadd.f32 %v983, %v1010
        %1012 = vmatmul.f32.gmra.mxu0 %v954
        %v1013 = vpop.f32.mrf.mxu0
        %v1014 = vadd.f32 %v983, %v1013
        %1015 = vmatmul.f32.gmra.mxu0 %v955
        %v1016 = vpop.f32.mrf.mxu0
        %v1017 = vadd.f32 %v983, %v1016
        %1018 = vmatmul.f32.gmra.mxu0 %v956
        %v1019 = vpop.f32.mrf.mxu0
        %v1020 = vadd.f32 %v983, %v1019
        %1021 = vmatmul.f32.gmra.mxu0 %v957
        %v1022 = vpop.f32.mrf.mxu0
        %v1023 = vadd.f32 %v983, %v1022
        %1024 = vmatmul.f32.gmra.mxu0 %v958
        %v1025 = vpop.f32.mrf.mxu0
        %v1026 = vadd.f32 %v983, %v1025
        %1027 = vmatmul.f32.gmra.mxu0 %v959
        %v1028 = vpop.f32.mrf.mxu0
        %v1029 = vadd.f32 %v983, %v1028
        %1030 = vmatmul.f32.gmra.mxu0 %v960
        %v1031 = vpop.f32.mrf.mxu0
        %v1032 = vadd.f32 %v983, %v1031
        %1033 = vmatmul.f32.gmra.mxu0 %v961
        %v1034 = vpop.f32.mrf.mxu0
        %v1035 = vadd.f32 %v983, %v1034
        %1036 = vmatmul.f32.gmra.mxu0 %v962
        %v1037 = vpop.f32.mrf.mxu0
        %v1038 = vadd.f32 %v983, %v1037
        %1039 = vmatmul.f32.gmra.mxu0 %v963
        %v1040 = vpop.f32.mrf.mxu0
        %v1041 = vadd.f32 %v983, %v1040
        %1042 = vmatmul.f32.gmra.mxu0 %v964
        %v1043 = vpop.f32.mrf.mxu0
        %v1044 = vadd.f32 %v983, %v1043
        %1045 = vmatmul.f32.gmra.mxu0 %v965
        %v1046 = vpop.f32.mrf.mxu0
        %v1047 = vadd.f32 %v983, %v1046
        %1048 = vdwg.mxu0
        %v1049 = vmul.f32 %v1002, 0.2
        %v1050 = vmul.f32 %v1005, 0.2
        %v1051 = vmul.f32 %v1008, 0.2
        %v1052 = vmul.f32 %v1011, 0.2
        %v1053 = vmul.f32 %v1014, 0.2
        %v1054 = vmul.f32 %v1017, 0.2
        %v1055 = vmul.f32 %v1020, 0.2
        %v1056 = vmul.f32 %v1023, 0.2
        %v1057 = vmul.f32 %v1026, 0.2
        %v1058 = vmul.f32 %v1029, 0.2
        %v1059 = vmul.f32 %v1032, 0.2
        %v1060 = vmul.f32 %v1035, 0.2
        %v1061 = vmul.f32 %v1038, 0.2
        %v1062 = vmul.f32 %v1041, 0.2
        %v1063 = vmul.f32 %v1044, 0.2
        %v1064 = vmul.f32 %v1047, 0.2
        %v1065 = vmax.f32 %v1002, %v1049
        %v1066 = vmax.f32 %v1005, %v1050
        %v1067 = vmax.f32 %v1008, %v1051
        %v1068 = vmax.f32 %v1011, %v1052
        %v1069 = vmax.f32 %v1014, %v1053
        %v1070 = vmax.f32 %v1017, %v1054
        %v1071 = vmax.f32 %v1020, %v1055
        %v1072 = vmax.f32 %v1023, %v1056
        %v1073 = vmax.f32 %v1026, %v1057
        %v1074 = vmax.f32 %v1029, %v1058
        %v1075 = vmax.f32 %v1032, %v1059
        %v1076 = vmax.f32 %v1035, %v1060
        %v1077 = vmax.f32 %v1038, %v1061
        %v1078 = vmax.f32 %v1041, %v1062
        %v1079 = vmax.f32 %v1044, %v1063
        %v1080 = vmax.f32 %v1047, %v1064
        %s1081 = scalar_lea.vmem [#allocation5], 384
        %v1082 = vld [vmem:[%s1081] sm:$0xff]
        %v1083 = vld [vmem:[%s1081 + $0x8] sm:$0xff]
        %v1084 = vld [vmem:[%s1081 + $0x10] sm:$0xff]
        %v1085 = vld [vmem:[%s1081 + $0x18] sm:$0xff]
        %v1086 = vld [vmem:[%s1081 + $0x20] sm:$0xff]
        %v1087 = vld [vmem:[%s1081 + $0x28] sm:$0xff]
        %v1088 = vld [vmem:[%s1081 + $0x30] sm:$0xff]
        %v1089 = vld [vmem:[%s1081 + $0x38] sm:$0xff]
        %v1090 = vld [vmem:[%s1081 + $0x40] sm:$0xff]
        %v1091 = vld [vmem:[%s1081 + $0x48] sm:$0xff]
        %v1092 = vld [vmem:[%s1081 + $0x50] sm:$0xff]
        %v1093 = vld [vmem:[%s1081 + $0x58] sm:$0xff]
        %v1094 = vld [vmem:[%s1081 + $0x60] sm:$0xff]
        %v1095 = vld [vmem:[%s1081 + $0x68] sm:$0xff]
        %v1096 = vld [vmem:[%s1081 + $0x70] sm:$0xff]
        %v1097 = vld [vmem:[%s1081 + $0x78] sm:$0xff]
        %v1098 = vperm.slane %v736, 3
        %1099 = vmatpush.msra.mxu0 %v1097
        %1100 = vmatpush.msra.mxu0 %v1096
        %1101 = vmatpush.msra.mxu0 %v1095
        %1102 = vmatpush.msra.mxu0 %v1094
        %1103 = vmatpush.msra.mxu0 %v1093
        %1104 = vmatpush.msra.mxu0 %v1092
        %1105 = vmatpush.msra.mxu0 %v1091
        %1106 = vmatpush.msra.mxu0 %v1090
        %1107 = vmatpush.msra.mxu0 %v1089
        %1108 = vmatpush.msra.mxu0 %v1088
        %1109 = vmatpush.msra.mxu0 %v1087
        %1110 = vmatpush.msra.mxu0 %v1086
        %1111 = vmatpush.msra.mxu0 %v1085
        %1112 = vmatpush.msra.mxu0 %v1084
        %1113 = vmatpush.msra.mxu0 %v1083
        %1114 = vmatpush.msra.mxu0 %v1082
        %1115 = vmatmul.f32.gmra.mxu0 %v1065
        %v1116 = vpop.f32.mrf.mxu0
        %v1117 = vadd.f32 %v1098, %v1116
        %1118 = vmatmul.f32.gmra.mxu0 %v1066
        %v1119 = vpop.f32.mrf.mxu0
        %v1120 = vadd.f32 %v1098, %v1119
        %1121 = vmatmul.f32.gmra.mxu0 %v1067
        %v1122 = vpop.f32.mrf.mxu0
        %v1123 = vadd.f32 %v1098, %v1122
        %1124 = vmatmul.f32.gmra.mxu0 %v1068
        %v1125 = vpop.f32.mrf.mxu0
        %v1126 = vadd.f32 %v1098, %v1125
        %1127 = vmatmul.f32.gmra.mxu0 %v1069
        %v1128 = vpop.f32.mrf.mxu0
        %v1129 = vadd.f32 %v1098, %v1128
        %1130 = vmatmul.f32.gmra.mxu0 %v1070
        %v1131 = vpop.f32.mrf.mxu0
        %v1132 = vadd.f32 %v1098, %v1131
        %1133 = vmatmul.f32.gmra.mxu0 %v1071
        %v1134 = vpop.f32.mrf.mxu0
        %v1135 = vadd.f32 %v1098, %v1134
        %1136 = vmatmul.f32.gmra.mxu0 %v1072
        %v1137 = vpop.f32.mrf.mxu0
        %v1138 = vadd.f32 %v1098, %v1137
        %1139 = vmatmul.f32.gmra.mxu0 %v1073
        %v1140 = vpop.f32.mrf.mxu0
        %v1141 = vadd.f32 %v1098, %v1140
        %1142 = vmatmul.f32.gmra.mxu0 %v1074
        %v1143 = vpop.f32.mrf.mxu0
        %v1144 = vadd.f32 %v1098, %v1143
        %1145 = vmatmul.f32.gmra.mxu0 %v1075
        %v1146 = vpop.f32.mrf.mxu0
        %v1147 = vadd.f32 %v1098, %v1146
        %1148 = vmatmul.f32.gmra.mxu0 %v1076
        %v1149 = vpop.f32.mrf.mxu0
        %v1150 = vadd.f32 %v1098, %v1149
        %1151 = vmatmul.f32.gmra.mxu0 %v1077
        %v1152 = vpop.f32.mrf.mxu0
        %v1153 = vadd.f32 %v1098, %v1152
        %1154 = vmatmul.f32.gmra.mxu0 %v1078
        %v1155 = vpop.f32.mrf.mxu0
        %v1156 = vadd.f32 %v1098, %v1155
        %1157 = vmatmul.f32.gmra.mxu0 %v1079
        %v1158 = vpop.f32.mrf.mxu0
        %v1159 = vadd.f32 %v1098, %v1158
        %1160 = vmatmul.f32.gmra.mxu0 %v1080
        %v1161 = vpop.f32.mrf.mxu0
        %v1162 = vadd.f32 %v1098, %v1161
        %1163 = vdwg.mxu0
        %v1164 = vmul.f32 %v1117, 0.2
        %v1165 = vmul.f32 %v1120, 0.2
        %v1166 = vmul.f32 %v1123, 0.2
        %v1167 = vmul.f32 %v1126, 0.2
        %v1168 = vmul.f32 %v1129, 0.2
        %v1169 = vmul.f32 %v1132, 0.2
        %v1170 = vmul.f32 %v1135, 0.2
        %v1171 = vmul.f32 %v1138, 0.2
        %v1172 = vmul.f32 %v1141, 0.2
        %v1173 = vmul.f32 %v1144, 0.2
        %v1174 = vmul.f32 %v1147, 0.2
        %v1175 = vmul.f32 %v1150, 0.2
        %v1176 = vmul.f32 %v1153, 0.2
        %v1177 = vmul.f32 %v1156, 0.2
        %v1178 = vmul.f32 %v1159, 0.2
        %v1179 = vmul.f32 %v1162, 0.2
        %v1180 = vmax.f32 %v1117, %v1164
        %v1181 = vmax.f32 %v1120, %v1165
        %v1182 = vmax.f32 %v1123, %v1166
        %v1183 = vmax.f32 %v1126, %v1167
        %v1184 = vmax.f32 %v1129, %v1168
        %v1185 = vmax.f32 %v1132, %v1169
        %v1186 = vmax.f32 %v1135, %v1170
        %v1187 = vmax.f32 %v1138, %v1171
        %v1188 = vmax.f32 %v1141, %v1172
        %v1189 = vmax.f32 %v1144, %v1173
        %v1190 = vmax.f32 %v1147, %v1174
        %v1191 = vmax.f32 %v1150, %v1175
        %v1192 = vmax.f32 %v1153, %v1176
        %v1193 = vmax.f32 %v1156, %v1177
        %v1194 = vmax.f32 %v1159, %v1178
        %v1195 = vmax.f32 %v1162, %v1179
        %1196 = vst [vmem:[%s221] sm:$0xff] %v1180
        %1197 = vst [vmem:[%s221 + $0x8] sm:$0xff] %v1181
        %1198 = vst [vmem:[%s221 + $0x10] sm:$0xff] %v1182
        %1199 = vst [vmem:[%s221 + $0x18] sm:$0xff] %v1183
        %1200 = vst [vmem:[%s221 + $0x20] sm:$0xff] %v1184
        %1201 = vst [vmem:[%s221 + $0x28] sm:$0xff] %v1185
        %1202 = vst [vmem:[%s221 + $0x30] sm:$0xff] %v1186
        %1203 = vst [vmem:[%s221 + $0x38] sm:$0xff] %v1187
        %1204 = vst [vmem:[%s221 + $0x40] sm:$0xff] %v1188
        %1205 = vst [vmem:[%s221 + $0x48] sm:$0xff] %v1189
        %1206 = vst [vmem:[%s221 + $0x50] sm:$0xff] %v1190
        %1207 = vst [vmem:[%s221 + $0x58] sm:$0xff] %v1191
        %1208 = vst [vmem:[%s221 + $0x60] sm:$0xff] %v1192
        %1209 = vst [vmem:[%s221 + $0x68] sm:$0xff] %v1193
        %1210 = vst [vmem:[%s221 + $0x70] sm:$0xff] %v1194
        %1211 = vst [vmem:[%s221 + $0x78] sm:$0xff] %v1195
        %s1212 = sand.u32 %s97, 1
        %s1213 = scalar_lea.sflag [#allocation4], %s1212
        %s1214 = sand.u32 %s97, 1
        %s1215 = smul.addr %s1214, 128
        %s1216 = scalar_lea.vmem [#allocation8], %s1215
        // Predicated region
        $region45: #{tpu_custom_call.1} parent=31 // pred_check
          %p1217 = pneg %p107
        $region46: #{tpu_custom_call.1} parent=31 // pred_check_branch
          %1219 = sbr.rel (%p1217) target = $region48
        $region47: #{tpu_custom_call.1} parent=31 // pred_region
          %s1220 = smul.u32 16, %s21
          %1222 = vsyncadd %s1213, 0
          %s1223 = smul.addr %s1220, 8
          %s1224 = scalar_lea.hbm %s3, %s1223
          %s1225 = sshll.u32 %s1216, 4
          %s1226 = int_to_ptr.vmem [resolvable:$true] %s1225
          %s1227 = sshll.u32 %s1224, 4
          %s1228 = int_to_ptr.hbm [resolvable:$true] %s1227
          %1233 = dma.vmem_to_hbm [thread:$0]  %s1226, 2048, %s1228, %s1213, 128, 128, 8
        $region48: #{tpu_custom_call.1} parent=31 // pred_fallthru
          _
      $region32: #{tpu_custom_call.1} parent=5 // pred_fallthru
        _
      %p1234 = scmp.le.s32.totalorder 2, %s16
      // Predicated region
      $region49: #{tpu_custom_call.1} parent=5 // pred_check
        %p1235 = pneg %p1234
      $region50: #{tpu_custom_call.1} parent=5 // pred_check_branch
        %1237 = sbr.rel (%p1235) target = $region52
      $region51: #{tpu_custom_call.1} parent=5 // pred_region
        %s1238 = ssub.s32 %s16, 2
        // Predicated region
        $region53: #{tpu_custom_call.1} parent=51 // pred_check
          %p1239 = pneg %p113
        $region54: #{tpu_custom_call.1} parent=51 // pred_check_branch
          %1241 = sbr.rel (%p1239) target = $region56
        $region55: #{tpu_custom_call.1} parent=51 // pred_region
          %s1242 = sand.u32 %s98, 1
          %s1243 = scalar_lea.sflag [#allocation4], %s1242
          %s1244 = sand.u32 %s98, 1
          %s1245 = smul.addr %s1244, 128
          %s1246 = scalar_lea.vmem [#allocation8], %s1245
          %1248 = dma.done %s1243, 2048
        $region56: #{tpu_custom_call.1} parent=51 // pred_fallthru
          _
      $region52: #{tpu_custom_call.1} parent=5 // pred_fallthru
        _
    $region6: #{tpu_custom_call.1} parent=1 // loop_footer
      %s20 = sadd.s32 1, %s16
    $region7: #{tpu_custom_call.1} parent=1 // loop_footer_branch
      %15 = sbr.rel target = $region3
    $region8: #{tpu_custom_call.1} parent=1 // loop_exit
      _
    %1249 = vsyncpa [#allocation3], 1
    %s1250 = scalar_lea.sflag [#allocation3], 1
    %1251 = vsyncpa %s1250, 1
    %1252 = vsyncpa [#allocation6], 1
    %1253 = vsyncpa [#allocation4], 1
    %s1254 = scalar_lea.sflag [#allocation4], 1
    %1255 = vsyncpa %s1254, 1

</llo_original>
